<compile_context>
chip_gen: v5e
topology: v5e:2x2
jax: 0.10.0
libtpu: 0.0.40
codegen_flags: <defaults>
</compile_context>

<pallas_src>
import itertools
import numpy as np
import jax
import jax.numpy as jnp
from jax.experimental import pallas as pl
from jax.experimental.pallas import tpu as pltpu


_HEAD_NAMES = [
    "pred_rel_logits",
    "sub_start_logits", "sub_end_logits",
    "obj_start_logits", "obj_end_logits",
    "aspect_start_logits", "aspect_end_logits",
    "opinion_start_logits", "opinion_end_logits",
]
_GOLD_KEYS = [
    "relation",
    "sub_start_index", "sub_end_index",
    "obj_start_index", "obj_end_index",
    "aspect_start_index", "aspect_end_index",
    "opinion_start_index", "opinion_end_index",
]


def _round_up(x, m):
    return ((x + m - 1) // m) * m


# --------------------------------------------------------------------------
# Pallas kernel
# --------------------------------------------------------------------------
def _make_cost_kernel(depths, seg_starts, seg_widths):
    n_heads = len(depths)

    def kernel(*refs):
        oh_ref = refs[0]                         # [k_pad, g_pad] bf16, resident
        logit_refs = refs[1:1 + n_heads]         # [TILE_N, depth_h] native dtype
        cost_ref = refs[1 + n_heads]             # [TILE_N, g_pad]  f32
        probs_scr = refs[2 + n_heads]            # [TILE_N, k_pad]  bf16

        tile_n = probs_scr.shape[0]

        # NOTE: if tile_n is pushed far beyond 512 with large seq_len, consider
        # chunking this unrolled loop (vreg pressure); at the defaults the f32
        # intermediates fit comfortably.
        for h in range(n_heads):
            d, off, w = depths[h], seg_starts[h], seg_widths[h]

            # Per-head softmax in f32; fold the leading negation into the
            # EUP reciprocal multiply.
            x = logit_refs[h][...].astype(jnp.float32)
            x = x - jnp.max(x, axis=-1, keepdims=True)
            e = jnp.exp(x)
            neg_inv = -pl.reciprocal(jnp.sum(e, axis=-1, keepdims=True),
                                     approx=True)
            seg = e * neg_inv                    # [tile_n, d] f32
            if w > d:
                # carry the padding lanes in the SAME store (they must stay
                # exactly zero: junk * 0 in the f32 MXU accumulate -> NaN).
                seg = jnp.concatenate(
                    [seg, jnp.zeros((tile_n, w - d), jnp.float32)], axis=-1)
            probs_scr[:, off:off + w] = seg.astype(probs_scr.dtype)

        # One fused bf16 MXU matmul == gather of gold columns + sum over all
        # nine heads (probabilities were pre-negated, so this IS the cost).
        cost_ref[...] = jnp.dot(probs_scr[...], oh_ref[...],
                                preferred_element_type=jnp.float32)

    return kernel


def _compute_cost_matrix(onehot, logits_list, depths, seg_starts, seg_widths,
                         tile, g_pad, vmem_limit):
    """onehot: [k_pad, g_pad] bf16; logits_list: 9 arrays [N_pad, depth_h].
    Returns cost [N_pad, g_pad] float32 (negated summed gathered probs)."""
    n_pad = logits_list[0].shape[0]
    k_pad = int(onehot.shape[0])
    n_heads = len(logits_list)
    grid = (n_pad // tile,)

    kernel = _make_cost_kernel(tuple(int(d) for d in depths),
                               tuple(int(s) for s in seg_starts),
                               tuple(int(w) for w in seg_widths))

    in_specs = [pl.BlockSpec((k_pad, g_pad), lambda i: (0, 0))]   # resident
    in_specs += [pl.BlockSpec((tile, int(d)), lambda i: (i, 0)) for d in depths]
    out_spec = pl.BlockSpec((tile, g_pad), lambda i: (i, 0))

    # Advisory cost estimate for XLA's scheduler.
    flops = 2 * n_pad * k_pad * g_pad
    transcendentals = n_pad * int(sum(depths)) + n_pad * n_heads
    bytes_accessed = int(sum(x.size * x.dtype.itemsize for x in logits_list)
                         + onehot.size * onehot.dtype.itemsize
                         + n_pad * g_pad * 4)

    return pl.pallas_call(
        kernel,
        out_shape=jax.ShapeDtypeStruct((n_pad, g_pad), jnp.float32),
        grid_spec=pltpu.PrefetchScalarGridSpec(
            num_scalar_prefetch=0,
            grid=grid,
            in_specs=in_specs,
            out_specs=out_spec,
            scratch_shapes=[
                pltpu.VMEM((tile, k_pad), jnp.bfloat16),   # stacked -probs
            ]),
        compiler_params=pltpu.CompilerParams(
            dimension_semantics=("parallel",),
            vmem_limit_bytes=int(vmem_limit)),
        cost_estimate=pl.CostEstimate(flops=int(flops),
                                      transcendentals=int(transcendentals),
                                      bytes_accessed=bytes_accessed),
    )(onehot, *logits_list)


# --------------------------------------------------------------------------
# Host-side linear sum assignment (Hungarian).  scipy if available, otherwise
# an exact brute-force for the small synthetic sizes used here.
# TODO(synk): linear_sum_assignment is an inherently sequential host algorithm
#             with no clean Pallas equivalent; kept on host.
# --------------------------------------------------------------------------
def _brute_lsa(cost):
    cost = np.asarray(cost)
    n, m = cost.shape
    if m == 0 or n == 0:
        return np.zeros((0,), np.int64), np.zeros((0,), np.int64)
    if m > n:
        cols, rows = _brute_lsa(cost.T)
        order = np.argsort(rows)
        return rows[order], cols[order]
    best_sum, best_rows = None, None
    for perm in itertools.permutations(range(n), m):
        s = cost[list(perm), np.arange(m)].sum()
        if best_sum is None or s < best_sum:
            best_sum, best_rows = s, np.array(perm)
    order = np.argsort(best_rows)
    return best_rows[order], np.arange(m)[order]


try:
    from scipy.optimize import linear_sum_assignment as _lsa
except Exception:  # pragma: no cover
    _lsa = _brute_lsa


# --------------------------------------------------------------------------
# HungarianMatcher forward
# --------------------------------------------------------------------------
def hungarian_matcher_forward(outputs, targets, matcher="avg", tile_n=None):
    if matcher != "avg":
        raise ValueError("Wrong matcher")

    bsz, num_q = outputs["pred_rel_logits"].shape[:2]
    num_classes = int(outputs["pred_rel_logits"].shape[2])
    seq_len = int(outputs["sub_start_logits"].shape[2])
    N = bsz * num_q

    # flatten (bsz, num_q, D) -> (N, D); keep the native dtype (DMA fewer bytes)
    logits_list = [outputs[n].reshape(N, -1) for n in _HEAD_NAMES]
    depths = [num_classes] + [seq_len] * 8

    # gold indices concatenated across the batch
    golds = [np.concatenate([np.asarray(t[k]).reshape(-1) for t in targets])
             for k in _GOLD_KEYS]
    num_gold = [int(np.asarray(t["relation"]).shape[0]) for t in targets]
    G = int(sum(num_gold))
    offsets = np.concatenate([[0], np.cumsum(num_gold)]).astype(np.int64)

    if G == 0:  # no gold triples anywhere: every prediction stays unmatched
        empty = np.zeros((0,), dtype=np.int64)
        return ([(empty.copy(), empty.copy()) for _ in range(bsz)],
                jnp.zeros((N, 0), jnp.float32))

    # lane-dense gold/output width
    g_pad = _round_up(G, 128)

    # ---- head-segment layout: packed (pad only total K) vs 128-aligned ----
    aligned_w = [_round_up(int(d), 128) for d in depths]
    k_aligned = int(sum(aligned_w))
    k_packed = _round_up(int(sum(depths)), 128)
    if k_packed < k_aligned:           # small depths -> shrink K (1152 -> 256)
        k_pad = k_packed
        seg_starts = [0]
        for d in depths[:-1]:
            seg_starts.append(seg_starts[-1] + int(d))
    else:                              # depths already ~128-multiples
        k_pad = k_aligned
        seg_starts = [0]
        for w in aligned_w[:-1]:
            seg_starts.append(seg_starts[-1] + int(w))
    seg_widths = [seg_starts[h + 1] - seg_starts[h]
                  for h in range(len(depths) - 1)]
    seg_widths.append(k_pad - seg_starts[-1])

    # ---- precomputed, grid-invariant stacked one-hot of gold indices ----
    oh_np = np.zeros((k_pad, g_pad), np.float32)
    cols = np.arange(G)
    for h, g in enumerate(golds):
        oh_np[seg_starts[h] + np.asarray(g, np.int64), cols] = 1.0
    onehot = jnp.asarray(oh_np, dtype=jnp.bfloat16)

    # ---- generation-aware tile / VMEM budgeting ----
    try:
        vmem_phys = int(pltpu.get_tpu_info().vmem_capacity_bytes)
    except Exception:  # pragma: no cover
        vmem_phys = 64 << 20          # conservative (v7x per-TC)
    itemsizes = [x.dtype.itemsize for x in logits_list]
    max_d = int(max(depths))

    def _vmem_need(t):
        return (sum(2 * t * int(d) * int(isz)          # double-buffered logits
                    for d, isz in zip(depths, itemsizes))
                + 2 * k_pad * g_pad * 2                # resident one-hot (x2 safe)
                + 2 * t * g_pad * 4                    # double-buffered output
                + t * k_pad * 2                        # probs scratch
                + 3 * t * max_d * 4)                   # f32 softmax working set

    n8 = max(8, _round_up(N, 8))
    if tile_n is None:
        budget = vmem_phys // 2
        tile = 8
        for cand in (1024, 512, 256, 128, 64, 32, 16, 8):
            t = min(cand, n8)
            if _vmem_need(t) <= budget or cand == 8:
                tile = t
                break
        # keep >= 2 grid steps so the ("parallel",) axis can feed both
        # TensorCores on v7x instead of leaving one idle.
        if _round_up(N, tile) // tile < 2 and N > 8:
            tile = max(8, _round_up((N + 1) // 2, 8))
    else:
        if tile_n % 8 != 0:
            raise ValueError("tile_n must be a multiple of 8")
        tile = min(int(tile_n), n8)
    tile = max(8, tile)

    # pad the row axis so the grid tiles evenly
    n_pad = _round_up(N, tile)
    if n_pad != N:
        logits_list = [jnp.pad(x, ((0, n_pad - N), (0, 0))) for x in logits_list]

    vmem_limit = int(min(max(_vmem_need(tile) + (8 << 20), 32 << 20),
                         (vmem_phys * 3) // 4))

    cost_dev = _compute_cost_matrix(onehot, logits_list, depths, seg_starts,
                                    seg_widths, tile, g_pad, vmem_limit)

    # slice on device BEFORE the only D2H transfer on the LSA critical path
    cost_ng = cost_dev[:N, :G]
    cost_np = np.asarray(cost_ng).reshape(bsz, num_q, G)
    indices = []
    for i in range(bsz):
        c_i = cost_np[i, :, offsets[i]:offsets[i + 1]]
        row, col = _lsa(c_i)
        indices.append((np.asarray(row, dtype=np.int64),
                        np.asarray(col, dtype=np.int64)))
    return indices, cost_ng


# --------------------------------------------------------------------------
if __name__ == "__main__":
    key = jax.random.PRNGKey(0)
    bsz, num_q, num_classes, seq_len = 2, 8, 5, 16

    ks = jax.random.split(key, 12)
    outputs = {
        "pred_rel_logits": jax.random.normal(ks[0], (bsz, num_q, num_classes), jnp.float32),
        "sub_start_logits": jax.random.normal(ks[1], (bsz, num_q, seq_len), jnp.float32),
        "sub_end_logits": jax.random.normal(ks[2], (bsz, num_q, seq_len), jnp.float32),
        "obj_start_logits": jax.random.normal(ks[3], (bsz, num_q, seq_len), jnp.float32),
        "obj_end_logits": jax.random.normal(ks[4], (bsz, num_q, seq_len), jnp.float32),
        "aspect_start_logits": jax.random.normal(ks[5], (bsz, num_q, seq_len), jnp.float32),
        "aspect_end_logits": jax.random.normal(ks[6], (bsz, num_q, seq_len), jnp.float32),
        "opinion_start_logits": jax.random.normal(ks[7], (bsz, num_q, seq_len), jnp.float32),
        "opinion_end_logits": jax.random.normal(ks[8], (bsz, num_q, seq_len), jnp.float32),
    }

    def make_target(k, n):
        kk = jax.random.split(k, 9)
        return {
            "relation": jax.random.randint(kk[0], (n,), 0, num_classes),
            "sub_start_index": jax.random.randint(kk[1], (n,), 0, seq_len),
            "sub_end_index": jax.random.randint(kk[2], (n,), 0, seq_len),
            "obj_start_index": jax.random.randint(kk[3], (n,), 0, seq_len),
            "obj_end_index": jax.random.randint(kk[4], (n,), 0, seq_len),
            "aspect_start_index": jax.random.randint(kk[5], (n,), 0, seq_len),
            "aspect_end_index": jax.random.randint(kk[6], (n,), 0, seq_len),
            "opinion_start_index": jax.random.randint(kk[7], (n,), 0, seq_len),
            "opinion_end_index": jax.random.randint(kk[8], (n,), 0, seq_len),
        }

    # batch 0 has 2 gold triples, batch 1 has 3
    targets = [make_target(ks[9], 2), make_target(ks[10], 3)]

    # tile_n=8 so the tiny demo still exercises a multi-step (grid=2) pipeline
    indices, cost = hungarian_matcher_forward(outputs, targets, matcher="avg", tile_n=8)
    cost = jax.block_until_ready(cost)

    # ---- reference check (pure numpy, float64; loose tol for bf16 MXU path) ----
    N, G = bsz * num_q, 5

    def np_softmax(x):
        x = np.asarray(x, np.float64).reshape(N, -1)
        x = x - x.max(-1, keepdims=True)
        e = np.exp(x)
        return e / e.sum(-1, keepdims=True)

    p = {n: np_softmax(outputs[n]) for n in _HEAD_NAMES}
    g = {k: np.concatenate([np.asarray(t[k]) for t in targets]) for k in _GOLD_KEYS}
    ref = -p["pred_rel_logits"][:, g["relation"]]
    ref = ref - (p["sub_start_logits"][:, g["sub_start_index"]]
                 + p["sub_end_logits"][:, g["sub_end_index"]])
    ref = ref - (p["obj_start_logits"][:, g["obj_start_index"]]
                 + p["obj_end_logits"][:, g["obj_end_index"]])
    ref = ref - (p["aspect_start_logits"][:, g["aspect_start_index"]]
                 + p["aspect_end_logits"][:, g["aspect_end_index"]])
    ref = ref - (p["opinion_start_logits"][:, g["opinion_start_index"]]
                 + p["opinion_end_logits"][:, g["opinion_end_index"]])

    got = np.asarray(cost)
    assert got.shape == (N, G)
    err = float(np.max(np.abs(got - ref)))
    assert err < 5e-2, f"cost mismatch, max abs err {err}"

    # sanity: per-batch match count = min(num_q, num_gold)
    assert len(indices) == bsz
    assert indices[0][0].shape[0] == 2 and indices[1][0].shape[0] == 3
    assert indices[0][0].dtype == np.int64 and indices[0][1].dtype == np.int64

    print("KERNEL_OK")
</pallas_src>

<mosaic_0001>
module attributes {stable_mosaic.version = 11 : i64} {
  func.func @kernel(%arg0: i32, %arg1: memref<256x128xbf16, #tpu.memory_space<vmem>>, %arg2: memref<8x5xf32, #tpu.memory_space<vmem>>, %arg3: memref<8x16xf32, #tpu.memory_space<vmem>>, %arg4: memref<8x16xf32, #tpu.memory_space<vmem>>, %arg5: memref<8x16xf32, #tpu.memory_space<vmem>>, %arg6: memref<8x16xf32, #tpu.memory_space<vmem>>, %arg7: memref<8x16xf32, #tpu.memory_space<vmem>>, %arg8: memref<8x16xf32, #tpu.memory_space<vmem>>, %arg9: memref<8x16xf32, #tpu.memory_space<vmem>>, %arg10: memref<8x16xf32, #tpu.memory_space<vmem>>, %arg11: memref<8x128xf32, #tpu.memory_space<vmem>>, %arg12: memref<8x256xbf16, #tpu.memory_space<vmem>>) attributes {dimension_semantics = [#tpu.dimension_semantics<parallel>], iteration_bounds = array<i64: 2>, scalar_prefetch = 0 : i64, scratch_operands = 1 : i64, tpu.core_type = #tpu.core_type<tc>, window_params = [{pipeline_mode = #tpu.pipeline_mode<synchronous>, transform_indices = @transform_0, window_bounds = array<i64: 256, 128>}, {transform_indices = @transform_1, window_bounds = array<i64: 8, 5>}, {transform_indices = @transform_2, window_bounds = array<i64: 8, 16>}, {transform_indices = @transform_3, window_bounds = array<i64: 8, 16>}, {transform_indices = @transform_4, window_bounds = array<i64: 8, 16>}, {transform_indices = @transform_5, window_bounds = array<i64: 8, 16>}, {transform_indices = @transform_6, window_bounds = array<i64: 8, 16>}, {transform_indices = @transform_7, window_bounds = array<i64: 8, 16>}, {transform_indices = @transform_8, window_bounds = array<i64: 8, 16>}, {transform_indices = @transform_9, window_bounds = array<i64: 8, 16>}, {transform_indices = @transform_10, window_bounds = array<i64: 8, 128>}]} {
    %c0 = arith.constant 0 : index
    %c0_0 = arith.constant 0 : index
    %0 = vector.load %arg2[%c0, %c0_0] : memref<8x5xf32, #tpu.memory_space<vmem>>, vector<8x5xf32>
    %cst = arith.constant dense<0xFF800000> : vector<8xf32>
    %1 = vector.multi_reduction <maximumf>, %0, %cst [1] : vector<8x5xf32> to vector<8xf32>
    %2 = vector.shape_cast %1 : vector<8xf32> to vector<8x1xf32>
    %3 = vector.broadcast %2 : vector<8x1xf32> to vector<8x5xf32>
    %4 = arith.subf %0, %3 : vector<8x5xf32>
    %5 = math.exp %4 : vector<8x5xf32>
    %cst_1 = arith.constant dense<0.000000e+00> : vector<8xf32>
    %6 = vector.multi_reduction <add>, %5, %cst_1 [1] : vector<8x5xf32> to vector<8xf32>
    %7 = vector.shape_cast %6 : vector<8xf32> to vector<8x1xf32>
    %8 = tpu.reciprocal %7 {approx = true} : vector<8x1xf32> -> vector<8x1xf32>
    %cst_2 = arith.constant 0.000000e+00 : f32
    %9 = vector.broadcast %cst_2 : f32 to vector<8x1xf32>
    %10 = arith.subf %9, %8 : vector<8x1xf32>
    %11 = vector.broadcast %10 : vector<8x1xf32> to vector<8x5xf32>
    %12 = arith.mulf %5, %11 : vector<8x5xf32>
    %13 = arith.truncf %12 : vector<8x5xf32> to vector<8x5xbf16>
    %c0_3 = arith.constant 0 : index
    %c0_4 = arith.constant 0 : index
    %14 = vector.load %arg12[%c0_3, %c0_4] : memref<8x256xbf16, #tpu.memory_space<vmem>>, vector<8x5xbf16>
    tpu.vector_store %arg12[%c0_3, %c0_4], %13 {strides = array<i32>} : memref<8x256xbf16, #tpu.memory_space<vmem>>, vector<8x5xbf16>,
    %c0_5 = arith.constant 0 : index
    %c0_6 = arith.constant 0 : index
    %15 = vector.load %arg3[%c0_5, %c0_6] : memref<8x16xf32, #tpu.memory_space<vmem>>, vector<8x16xf32>
    %cst_7 = arith.constant dense<0xFF800000> : vector<8xf32>
    %16 = vector.multi_reduction <maximumf>, %15, %cst_7 [1] : vector<8x16xf32> to vector<8xf32>
    %17 = vector.shape_cast %16 : vector<8xf32> to vector<8x1xf32>
    %18 = vector.broadcast %17 : vector<8x1xf32> to vector<8x16xf32>
    %19 = arith.subf %15, %18 : vector<8x16xf32>
    %20 = math.exp %19 : vector<8x16xf32>
    %cst_8 = arith.constant dense<0.000000e+00> : vector<8xf32>
    %21 = vector.multi_reduction <add>, %20, %cst_8 [1] : vector<8x16xf32> to vector<8xf32>
    %22 = vector.shape_cast %21 : vector<8xf32> to vector<8x1xf32>
    %23 = tpu.reciprocal %22 {approx = true} : vector<8x1xf32> -> vector<8x1xf32>
    %cst_9 = arith.constant 0.000000e+00 : f32
    %24 = vector.broadcast %cst_9 : f32 to vector<8x1xf32>
    %25 = arith.subf %24, %23 : vector<8x1xf32>
    %26 = vector.broadcast %25 : vector<8x1xf32> to vector<8x16xf32>
    %27 = arith.mulf %20, %26 : vector<8x16xf32>
    %28 = arith.truncf %27 : vector<8x16xf32> to vector<8x16xbf16>
    %c0_10 = arith.constant 0 : index
    %c5 = arith.constant 5 : index
    %29 = vector.load %arg12[%c0_10, %c5] : memref<8x256xbf16, #tpu.memory_space<vmem>>, vector<8x16xbf16>
    tpu.vector_store %arg12[%c0_10, %c5], %28 {strides = array<i32>} : memref<8x256xbf16, #tpu.memory_space<vmem>>, vector<8x16xbf16>,
    %c0_11 = arith.constant 0 : index
    %c0_12 = arith.constant 0 : index
    %30 = vector.load %arg4[%c0_11, %c0_12] : memref<8x16xf32, #tpu.memory_space<vmem>>, vector<8x16xf32>
    %cst_13 = arith.constant dense<0xFF800000> : vector<8xf32>
    %31 = vector.multi_reduction <maximumf>, %30, %cst_13 [1] : vector<8x16xf32> to vector<8xf32>
    %32 = vector.shape_cast %31 : vector<8xf32> to vector<8x1xf32>
    %33 = vector.broadcast %32 : vector<8x1xf32> to vector<8x16xf32>
    %34 = arith.subf %30, %33 : vector<8x16xf32>
    %35 = math.exp %34 : vector<8x16xf32>
    %cst_14 = arith.constant dense<0.000000e+00> : vector<8xf32>
    %36 = vector.multi_reduction <add>, %35, %cst_14 [1] : vector<8x16xf32> to vector<8xf32>
    %37 = vector.shape_cast %36 : vector<8xf32> to vector<8x1xf32>
    %38 = tpu.reciprocal %37 {approx = true} : vector<8x1xf32> -> vector<8x1xf32>
    %cst_15 = arith.constant 0.000000e+00 : f32
    %39 = vector.broadcast %cst_15 : f32 to vector<8x1xf32>
    %40 = arith.subf %39, %38 : vector<8x1xf32>
    %41 = vector.broadcast %40 : vector<8x1xf32> to vector<8x16xf32>
    %42 = arith.mulf %35, %41 : vector<8x16xf32>
    %43 = arith.truncf %42 : vector<8x16xf32> to vector<8x16xbf16>
    %c0_16 = arith.constant 0 : index
    %c21 = arith.constant 21 : index
    %44 = vector.load %arg12[%c0_16, %c21] : memref<8x256xbf16, #tpu.memory_space<vmem>>, vector<8x16xbf16>
    tpu.vector_store %arg12[%c0_16, %c21], %43 {strides = array<i32>} : memref<8x256xbf16, #tpu.memory_space<vmem>>, vector<8x16xbf16>,
    %c0_17 = arith.constant 0 : index
    %c0_18 = arith.constant 0 : index
    %45 = vector.load %arg5[%c0_17, %c0_18] : memref<8x16xf32, #tpu.memory_space<vmem>>, vector<8x16xf32>
    %cst_19 = arith.constant dense<0xFF800000> : vector<8xf32>
    %46 = vector.multi_reduction <maximumf>, %45, %cst_19 [1] : vector<8x16xf32> to vector<8xf32>
    %47 = vector.shape_cast %46 : vector<8xf32> to vector<8x1xf32>
    %48 = vector.broadcast %47 : vector<8x1xf32> to vector<8x16xf32>
    %49 = arith.subf %45, %48 : vector<8x16xf32>
    %50 = math.exp %49 : vector<8x16xf32>
    %cst_20 = arith.constant dense<0.000000e+00> : vector<8xf32>
    %51 = vector.multi_reduction <add>, %50, %cst_20 [1] : vector<8x16xf32> to vector<8xf32>
    %52 = vector.shape_cast %51 : vector<8xf32> to vector<8x1xf32>
    %53 = tpu.reciprocal %52 {approx = true} : vector<8x1xf32> -> vector<8x1xf32>
    %cst_21 = arith.constant 0.000000e+00 : f32
    %54 = vector.broadcast %cst_21 : f32 to vector<8x1xf32>
    %55 = arith.subf %54, %53 : vector<8x1xf32>
    %56 = vector.broadcast %55 : vector<8x1xf32> to vector<8x16xf32>
    %57 = arith.mulf %50, %56 : vector<8x16xf32>
    %58 = arith.truncf %57 : vector<8x16xf32> to vector<8x16xbf16>
    %c0_22 = arith.constant 0 : index
    %c37 = arith.constant 37 : index
    %59 = vector.load %arg12[%c0_22, %c37] : memref<8x256xbf16, #tpu.memory_space<vmem>>, vector<8x16xbf16>
    tpu.vector_store %arg12[%c0_22, %c37], %58 {strides = array<i32>} : memref<8x256xbf16, #tpu.memory_space<vmem>>, vector<8x16xbf16>,
    %c0_23 = arith.constant 0 : index
    %c0_24 = arith.constant 0 : index
    %60 = vector.load %arg6[%c0_23, %c0_24] : memref<8x16xf32, #tpu.memory_space<vmem>>, vector<8x16xf32>
    %cst_25 = arith.constant dense<0xFF800000> : vector<8xf32>
    %61 = vector.multi_reduction <maximumf>, %60, %cst_25 [1] : vector<8x16xf32> to vector<8xf32>
    %62 = vector.shape_cast %61 : vector<8xf32> to vector<8x1xf32>
    %63 = vector.broadcast %62 : vector<8x1xf32> to vector<8x16xf32>
    %64 = arith.subf %60, %63 : vector<8x16xf32>
    %65 = math.exp %64 : vector<8x16xf32>
    %cst_26 = arith.constant dense<0.000000e+00> : vector<8xf32>
    %66 = vector.multi_reduction <add>, %65, %cst_26 [1] : vector<8x16xf32> to vector<8xf32>
    %67 = vector.shape_cast %66 : vector<8xf32> to vector<8x1xf32>
    %68 = tpu.reciprocal %67 {approx = true} : vector<8x1xf32> -> vector<8x1xf32>
    %cst_27 = arith.constant 0.000000e+00 : f32
    %69 = vector.broadcast %cst_27 : f32 to vector<8x1xf32>
    %70 = arith.subf %69, %68 : vector<8x1xf32>
    %71 = vector.broadcast %70 : vector<8x1xf32> to vector<8x16xf32>
    %72 = arith.mulf %65, %71 : vector<8x16xf32>
    %73 = arith.truncf %72 : vector<8x16xf32> to vector<8x16xbf16>
    %c0_28 = arith.constant 0 : index
    %c53 = arith.constant 53 : index
    %74 = vector.load %arg12[%c0_28, %c53] : memref<8x256xbf16, #tpu.memory_space<vmem>>, vector<8x16xbf16>
    tpu.vector_store %arg12[%c0_28, %c53], %73 {strides = array<i32>} : memref<8x256xbf16, #tpu.memory_space<vmem>>, vector<8x16xbf16>,
    %c0_29 = arith.constant 0 : index
    %c0_30 = arith.constant 0 : index
    %75 = vector.load %arg7[%c0_29, %c0_30] : memref<8x16xf32, #tpu.memory_space<vmem>>, vector<8x16xf32>
    %cst_31 = arith.constant dense<0xFF800000> : vector<8xf32>
    %76 = vector.multi_reduction <maximumf>, %75, %cst_31 [1] : vector<8x16xf32> to vector<8xf32>
    %77 = vector.shape_cast %76 : vector<8xf32> to vector<8x1xf32>
    %78 = vector.broadcast %77 : vector<8x1xf32> to vector<8x16xf32>
    %79 = arith.subf %75, %78 : vector<8x16xf32>
    %80 = math.exp %79 : vector<8x16xf32>
    %cst_32 = arith.constant dense<0.000000e+00> : vector<8xf32>
    %81 = vector.multi_reduction <add>, %80, %cst_32 [1] : vector<8x16xf32> to vector<8xf32>
    %82 = vector.shape_cast %81 : vector<8xf32> to vector<8x1xf32>
    %83 = tpu.reciprocal %82 {approx = true} : vector<8x1xf32> -> vector<8x1xf32>
    %cst_33 = arith.constant 0.000000e+00 : f32
    %84 = vector.broadcast %cst_33 : f32 to vector<8x1xf32>
    %85 = arith.subf %84, %83 : vector<8x1xf32>
    %86 = vector.broadcast %85 : vector<8x1xf32> to vector<8x16xf32>
    %87 = arith.mulf %80, %86 : vector<8x16xf32>
    %88 = arith.truncf %87 : vector<8x16xf32> to vector<8x16xbf16>
    %c0_34 = arith.constant 0 : index
    %c69 = arith.constant 69 : index
    %89 = vector.load %arg12[%c0_34, %c69] : memref<8x256xbf16, #tpu.memory_space<vmem>>, vector<8x16xbf16>
    tpu.vector_store %arg12[%c0_34, %c69], %88 {strides = array<i32>} : memref<8x256xbf16, #tpu.memory_space<vmem>>, vector<8x16xbf16>,
    %c0_35 = arith.constant 0 : index
    %c0_36 = arith.constant 0 : index
    %90 = vector.load %arg8[%c0_35, %c0_36] : memref<8x16xf32, #tpu.memory_space<vmem>>, vector<8x16xf32>
    %cst_37 = arith.constant dense<0xFF800000> : vector<8xf32>
    %91 = vector.multi_reduction <maximumf>, %90, %cst_37 [1] : vector<8x16xf32> to vector<8xf32>
    %92 = vector.shape_cast %91 : vector<8xf32> to vector<8x1xf32>
    %93 = vector.broadcast %92 : vector<8x1xf32> to vector<8x16xf32>
    %94 = arith.subf %90, %93 : vector<8x16xf32>
    %95 = math.exp %94 : vector<8x16xf32>
    %cst_38 = arith.constant dense<0.000000e+00> : vector<8xf32>
    %96 = vector.multi_reduction <add>, %95, %cst_38 [1] : vector<8x16xf32> to vector<8xf32>
    %97 = vector.shape_cast %96 : vector<8xf32> to vector<8x1xf32>
    %98 = tpu.reciprocal %97 {approx = true} : vector<8x1xf32> -> vector<8x1xf32>
    %cst_39 = arith.constant 0.000000e+00 : f32
    %99 = vector.broadcast %cst_39 : f32 to vector<8x1xf32>
    %100 = arith.subf %99, %98 : vector<8x1xf32>
    %101 = vector.broadcast %100 : vector<8x1xf32> to vector<8x16xf32>
    %102 = arith.mulf %95, %101 : vector<8x16xf32>
    %103 = arith.truncf %102 : vector<8x16xf32> to vector<8x16xbf16>
    %c0_40 = arith.constant 0 : index
    %c85 = arith.constant 85 : index
    %104 = vector.load %arg12[%c0_40, %c85] : memref<8x256xbf16, #tpu.memory_space<vmem>>, vector<8x16xbf16>
    tpu.vector_store %arg12[%c0_40, %c85], %103 {strides = array<i32>} : memref<8x256xbf16, #tpu.memory_space<vmem>>, vector<8x16xbf16>,
    %c0_41 = arith.constant 0 : index
    %c0_42 = arith.constant 0 : index
    %105 = vector.load %arg9[%c0_41, %c0_42] : memref<8x16xf32, #tpu.memory_space<vmem>>, vector<8x16xf32>
    %cst_43 = arith.constant dense<0xFF800000> : vector<8xf32>
    %106 = vector.multi_reduction <maximumf>, %105, %cst_43 [1] : vector<8x16xf32> to vector<8xf32>
    %107 = vector.shape_cast %106 : vector<8xf32> to vector<8x1xf32>
    %108 = vector.broadcast %107 : vector<8x1xf32> to vector<8x16xf32>
    %109 = arith.subf %105, %108 : vector<8x16xf32>
    %110 = math.exp %109 : vector<8x16xf32>
    %cst_44 = arith.constant dense<0.000000e+00> : vector<8xf32>
    %111 = vector.multi_reduction <add>, %110, %cst_44 [1] : vector<8x16xf32> to vector<8xf32>
    %112 = vector.shape_cast %111 : vector<8xf32> to vector<8x1xf32>
    %113 = tpu.reciprocal %112 {approx = true} : vector<8x1xf32> -> vector<8x1xf32>
    %cst_45 = arith.constant 0.000000e+00 : f32
    %114 = vector.broadcast %cst_45 : f32 to vector<8x1xf32>
    %115 = arith.subf %114, %113 : vector<8x1xf32>
    %116 = vector.broadcast %115 : vector<8x1xf32> to vector<8x16xf32>
    %117 = arith.mulf %110, %116 : vector<8x16xf32>
    %118 = arith.truncf %117 : vector<8x16xf32> to vector<8x16xbf16>
    %c0_46 = arith.constant 0 : index
    %c101 = arith.constant 101 : index
    %119 = vector.load %arg12[%c0_46, %c101] : memref<8x256xbf16, #tpu.memory_space<vmem>>, vector<8x16xbf16>
    tpu.vector_store %arg12[%c0_46, %c101], %118 {strides = array<i32>} : memref<8x256xbf16, #tpu.memory_space<vmem>>, vector<8x16xbf16>,
    %c0_47 = arith.constant 0 : index
    %c0_48 = arith.constant 0 : index
    %120 = vector.load %arg10[%c0_47, %c0_48] : memref<8x16xf32, #tpu.memory_space<vmem>>, vector<8x16xf32>
    %cst_49 = arith.constant dense<0xFF800000> : vector<8xf32>
    %121 = vector.multi_reduction <maximumf>, %120, %cst_49 [1] : vector<8x16xf32> to vector<8xf32>
    %122 = vector.shape_cast %121 : vector<8xf32> to vector<8x1xf32>
    %123 = vector.broadcast %122 : vector<8x1xf32> to vector<8x16xf32>
    %124 = arith.subf %120, %123 : vector<8x16xf32>
    %125 = math.exp %124 : vector<8x16xf32>
    %cst_50 = arith.constant dense<0.000000e+00> : vector<8xf32>
    %126 = vector.multi_reduction <add>, %125, %cst_50 [1] : vector<8x16xf32> to vector<8xf32>
    %127 = vector.shape_cast %126 : vector<8xf32> to vector<8x1xf32>
    %128 = tpu.reciprocal %127 {approx = true} : vector<8x1xf32> -> vector<8x1xf32>
    %cst_51 = arith.constant 0.000000e+00 : f32
    %129 = vector.broadcast %cst_51 : f32 to vector<8x1xf32>
    %130 = arith.subf %129, %128 : vector<8x1xf32>
    %131 = vector.broadcast %130 : vector<8x1xf32> to vector<8x16xf32>
    %132 = arith.mulf %125, %131 : vector<8x16xf32>
    %cst_52 = arith.constant 0.000000e+00 : f32
    %133 = vector.broadcast %cst_52 : f32 to vector<8x123xf32>
    %134 = tpu.concatenate %132, %133 in 1 : vector<8x16xf32>, vector<8x123xf32> -> vector<8x139xf32>
    %135 = arith.truncf %134 : vector<8x139xf32> to vector<8x139xbf16>
    %c0_53 = arith.constant 0 : index
    %c117 = arith.constant 117 : index
    %136 = vector.load %arg12[%c0_53, %c117] : memref<8x256xbf16, #tpu.memory_space<vmem>>, vector<8x139xbf16>
    tpu.vector_store %arg12[%c0_53, %c117], %135 {strides = array<i32>} : memref<8x256xbf16, #tpu.memory_space<vmem>>, vector<8x139xbf16>,
    %c0_54 = arith.constant 0 : index
    %c0_55 = arith.constant 0 : index
    %137 = vector.load %arg12[%c0_54, %c0_55] : memref<8x256xbf16, #tpu.memory_space<vmem>>, vector<8x256xbf16>
    %c0_56 = arith.constant 0 : index
    %c0_57 = arith.constant 0 : index
    %138 = vector.load %arg1[%c0_56, %c0_57] : memref<256x128xbf16, #tpu.memory_space<vmem>>, vector<256x128xbf16>
    %cst_58 = arith.constant dense<0.000000e+00> : vector<8x128xf32>
    %139 = tpu.matmul %137, %138, %cst_58 {dimension_numbers = #tpu.dot_dimension_numbers<[1], [0], [0], [1], [0, 0, 1, 1], [], []>} : vector<8x256xbf16>, vector<256x128xbf16>, vector<8x128xf32> -> vector<8x128xf32>
    %c0_59 = arith.constant 0 : index
    %c0_60 = arith.constant 0 : index
    %140 = vector.load %arg11[%c0_59, %c0_60] : memref<8x128xf32, #tpu.memory_space<vmem>>, vector<8x128xf32>
    tpu.vector_store %arg11[%c0_59, %c0_60], %139 {strides = array<i32>} : memref<8x128xf32, #tpu.memory_space<vmem>>, vector<8x128xf32>,
    return
  }
  func.func @transform_0(%arg0: i32) -> (i32, i32) {
    %c0_i32 = arith.constant 0 : i32
    %c0_i32_0 = arith.constant 0 : i32
    %c0_i32_1 = arith.constant 0 : i32
    return %c0_i32, %c0_i32_0 : i32, i32
  }
  func.func @transform_1(%arg0: i32) -> (i32, i32) {
    %c0_i32 = arith.constant 0 : i32
    %c0_i32_0 = arith.constant 0 : i32
    return %arg0, %c0_i32 : i32, i32
  }
  func.func @transform_2(%arg0: i32) -> (i32, i32) {
    %c0_i32 = arith.constant 0 : i32
    %c0_i32_0 = arith.constant 0 : i32
    return %arg0, %c0_i32 : i32, i32
  }
  func.func @transform_3(%arg0: i32) -> (i32, i32) {
    %c0_i32 = arith.constant 0 : i32
    %c0_i32_0 = arith.constant 0 : i32
    return %arg0, %c0_i32 : i32, i32
  }
  func.func @transform_4(%arg0: i32) -> (i32, i32) {
    %c0_i32 = arith.constant 0 : i32
    %c0_i32_0 = arith.constant 0 : i32
    return %arg0, %c0_i32 : i32, i32
  }
  func.func @transform_5(%arg0: i32) -> (i32, i32) {
    %c0_i32 = arith.constant 0 : i32
    %c0_i32_0 = arith.constant 0 : i32
    return %arg0, %c0_i32 : i32, i32
  }
  func.func @transform_6(%arg0: i32) -> (i32, i32) {
    %c0_i32 = arith.constant 0 : i32
    %c0_i32_0 = arith.constant 0 : i32
    return %arg0, %c0_i32 : i32, i32
  }
  func.func @transform_7(%arg0: i32) -> (i32, i32) {
    %c0_i32 = arith.constant 0 : i32
    %c0_i32_0 = arith.constant 0 : i32
    return %arg0, %c0_i32 : i32, i32
  }
  func.func @transform_8(%arg0: i32) -> (i32, i32) {
    %c0_i32 = arith.constant 0 : i32
    %c0_i32_0 = arith.constant 0 : i32
    return %arg0, %c0_i32 : i32, i32
  }
  func.func @transform_9(%arg0: i32) -> (i32, i32) {
    %c0_i32 = arith.constant 0 : i32
    %c0_i32_0 = arith.constant 0 : i32
    return %arg0, %c0_i32 : i32, i32
  }
  func.func @transform_10(%arg0: i32) -> (i32, i32) {
    %c0_i32 = arith.constant 0 : i32
    %c0_i32_0 = arith.constant 0 : i32
    return %arg0, %c0_i32 : i32, i32
  }
}

</mosaic_0001>

<llo_original>
// kernel: tpu_custom_call.1
$region0: #{tpu_custom_call.1}
  #allocation0 [shape = 'u32[]', space=smem, size = 0x4, offset = 0x4, fixed_abs, tag = 'smem constant byte address 0x4 - core index']
  #allocation1 [shape = 'u32[72,128]{1,0:T(1,128)}', space=vmem, size = 0x9000, scoped, tag = 'internal scratch']
  #allocation2 [shape = 'bf16[8,256]{1,0:T(8,128)(2,1)}', space=vmem, size = 0x1000, scoped, tag = 'scratch operand']
  %s0 = inlined_call_operand.hbm [shape: bf16[256,128], index: 0, kind: input, shape index: {}]
  %s1 = inlined_call_operand.vmem [shape: f32[16,5], index: 1, kind: input, shape index: {}]
  %s2 = inlined_call_operand.vmem [shape: f32[16,16], index: 2, kind: input, shape index: {}]
  %s3 = inlined_call_operand.hbm [shape: f32[16,16], index: 3, kind: input, shape index: {}]
  %s4 = inlined_call_operand.hbm [shape: f32[16,16], index: 4, kind: input, shape index: {}]
  %s5 = inlined_call_operand.hbm [shape: f32[16,16], index: 5, kind: input, shape index: {}]
  %s6 = inlined_call_operand.hbm [shape: f32[16,16], index: 6, kind: input, shape index: {}]
  %s7 = inlined_call_operand.hbm [shape: f32[16,16], index: 7, kind: input, shape index: {}]
  %s8 = inlined_call_operand.hbm [shape: f32[16,16], index: 8, kind: input, shape index: {}]
  %s9 = inlined_call_operand.vmem [shape: f32[16,16], index: 9, kind: input, shape index: {}]
  %s10 = inlined_call_operand.hbm [shape: f32[16,128], index: 10, kind: output, shape index: {}]
  %s11 = sld [smem:[#allocation0]]
  $region101: #{tpu_custom_call.1} parent=0
    _
  %s13 = ssub.s32 1, %s11
  %s14 = scalar_select 0, %s13, %s11
  $region1: #{tpu_custom_call.1} parent=0
    #allocation3 [shape = 'u8[65536]{0}', space=vmem, size = 0x10000, scoped, tag = 'input window, operand 0, single buffered']
    #allocation4 [shape = 's32[2]{0}', space=sflag, size = 0x8, scoped, tag = 'scoped memory for tpu_custom_call.1']
    #allocation5 [shape = 's32[2]{0}', space=sflag, size = 0x8, scoped, tag = 'scoped memory for tpu_custom_call.1']
    #allocation6 [shape = 'u8[8192]{0}', space=vmem, size = 0x2000, scoped, tag = 'input window, operand 3']
    #allocation7 [shape = 's32[2]{0}', space=sflag, size = 0x8, scoped, tag = 'scoped memory for tpu_custom_call.1']
    #allocation8 [shape = 'u8[8192]{0}', space=vmem, size = 0x2000, scoped, tag = 'input window, operand 4']
    #allocation9 [shape = 'u8[8192]{0}', space=vmem, size = 0x2000, scoped, tag = 'input window, operand 5']
    #allocation10 [shape = 's32[2]{0}', space=sflag, size = 0x8, scoped, tag = 'scoped memory for tpu_custom_call.1']
    #allocation11 [shape = 'u8[8192]{0}', space=vmem, size = 0x2000, scoped, tag = 'input window, operand 6']
    #allocation12 [shape = 'u8[8192]{0}', space=vmem, size = 0x2000, scoped, tag = 'input window, operand 7']
    #allocation13 [shape = 's32[2]{0}', space=sflag, size = 0x8, scoped, tag = 'scoped memory for tpu_custom_call.1']
    #allocation14 [shape = 'u8[8192]{0}', space=vmem, size = 0x2000, scoped, tag = 'input window, operand 8']
    #allocation15 [shape = 'u8[8192]{0}', space=vmem, size = 0x2000, scoped, tag = 'output window, operand 0']
    %15 = vsyncpa [#allocation4], 0
    %16 = vsyncpa [#allocation7], 0
    %s17 = scalar_lea.sflag [#allocation7], 1
    %18 = vsyncpa %s17, 0
    %19 = vsyncpa [#allocation10], 0
    %s20 = scalar_lea.sflag [#allocation10], 1
    %21 = vsyncpa %s20, 0
    %22 = vsyncpa [#allocation13], 0
    %s23 = scalar_lea.sflag [#allocation13], 1
    %24 = vsyncpa %s23, 0
    %25 = vsyncpa [#allocation5], 0
    %s26 = scalar_lea.sflag [#allocation5], 1
    %27 = vsyncpa %s26, 0
    loop: start=0, step=1, limit=4
    $region2: #{tpu_custom_call.1} parent=1 // loop_pre_header
      _
    $region3: #{tpu_custom_call.1} parent=1 // loop_header
      %s29 = sphi 0, %s33
      %p30 = scmp.ge.s32.totalorder %s29, 4
      %s37 = sphi 0, %s37
      %s39 = sphi 0, %s37
      %s40 = sphi 0, %s39
      %s54 = sphi 0, %s40
      %s60 = sphi 0, %s62
      %s63 = sphi 0, %s60
      %s64 = sphi 0, %s63
      %s80 = sphi 0, %s64
      %s86 = sphi 0, %s88
      %s89 = sphi 0, %s86
      %s90 = sphi 0, %s89
      %s106 = sphi 0, %s90
      %s112 = sphi 0, %s114
      %s115 = sphi 0, %s112
      %s116 = sphi 0, %s115
      %s132 = sphi 0, %s116
      %s138 = sphi 0, %s140
      %s141 = sphi 0, %s138
      %s142 = sphi 0, %s141
      %s158 = sphi 0, %s142
      %s164 = sphi 0, %s166
      %s167 = sphi 0, %s164
      %s168 = sphi 0, %s167
      %s184 = sphi 0, %s168
      %s190 = sphi 0, %s192
      %s193 = sphi 0, %s190
      %s194 = sphi 0, %s193
      %s210 = sphi 0, %s194
      %s216 = sphi 0, %s218
      %s219 = sphi 0, %s216
      %s220 = sphi 0, %s219
      %s236 = sphi 0, %s220
      %s242 = sphi 0, %s244
      %s245 = sphi 0, %s242
      %s246 = sphi 0, %s245
      %s262 = sphi 0, %s246
      %s268 = sphi 0, %s270
      %s271 = sphi 0, %s268
      %s272 = sphi 0, %s271
      %s288 = sphi 0, %s272
      %s294 = sphi 0, %s296
      %s297 = sphi 0, %s294
      %s298 = sphi 0, %s297
      %s314 = sphi 0, %s298
    $region4: #{tpu_custom_call.1} parent=1 // loop_header_branch
      %32 = sbr.rel (%p30) target = $region8
    $region5: #{tpu_custom_call.1} parent=1 // loop_body
      %s34 = ssub.s32 %s29, 1
      %s35 = ssub.s32 %s29, 2
      %s36 = sadd.s32 %s29, 1
      %s38 = sadd.s32 %s37, 1
      %p41 = scmp.eq.s32.totalorder %s29, 1
      %p42 = scmp.ne.s32.totalorder %s37, %s39
      %p43 = scmp.eq.s32.totalorder %s29, 0
      %p44 = por %p42, %p43
      %p45 = scmp.ne.s32.totalorder %s37, %s39
      %p46 = scmp.eq.s32.totalorder %s34, 1
      %p47 = por %p45, %p46
      %p48 = scmp.ne.s32.totalorder %s39, %s40
      %p49 = scmp.eq.s32.totalorder %s34, 0
      %p50 = por %p48, %p49
      %p51 = scmp.ne.s32.totalorder %s39, %s40
      %p52 = scmp.eq.s32.totalorder %s35, 1
      %p53 = por %p51, %p52
      %p55 = scmp.ne.s32.totalorder %s40, %s54
      %p56 = scmp.eq.s32.totalorder %s35, 0
      %p57 = por %p55, %p56
      %s58 = ssub.s32 %s29, %s36
      %p59 = scmp.eq.s32.totalorder %s58, 0
      %s61 = sadd.s32 %s60, 1
      %s62 = scalar_select %p59, %s60, %s61
      %p65 = pneg %p59
      %p66 = scmp.eq.s32.totalorder %s29, 1
      %p67 = por %p65, %p66
      %p68 = scmp.ne.s32.totalorder %s60, %s63
      %p69 = scmp.eq.s32.totalorder %s29, 0
      %p70 = por %p68, %p69
      %p71 = scmp.ne.s32.totalorder %s60, %s63
      %p72 = scmp.eq.s32.totalorder %s34, 1
      %p73 = por %p71, %p72
      %p74 = scmp.ne.s32.totalorder %s63, %s64
      %p75 = scmp.eq.s32.totalorder %s34, 0
      %p76 = por %p74, %p75
      %p77 = scmp.ne.s32.totalorder %s63, %s64
      %p78 = scmp.eq.s32.totalorder %s35, 1
      %p79 = por %p77, %p78
      %p81 = scmp.ne.s32.totalorder %s64, %s80
      %p82 = scmp.eq.s32.totalorder %s35, 0
      %p83 = por %p81, %p82
      %s84 = ssub.s32 %s29, %s36
      %p85 = scmp.eq.s32.totalorder %s84, 0
      %s87 = sadd.s32 %s86, 1
      %s88 = scalar_select %p85, %s86, %s87
      %p91 = pneg %p85
      %p92 = scmp.eq.s32.totalorder %s29, 1
      %p93 = por %p91, %p92
      %p94 = scmp.ne.s32.totalorder %s86, %s89
      %p95 = scmp.eq.s32.totalorder %s29, 0
      %p96 = por %p94, %p95
      %p97 = scmp.ne.s32.totalorder %s86, %s89
      %p98 = scmp.eq.s32.totalorder %s34, 1
      %p99 = por %p97, %p98
      %p100 = scmp.ne.s32.totalorder %s89, %s90
      %p101 = scmp.eq.s32.totalorder %s34, 0
      %p102 = por %p100, %p101
      %p103 = scmp.ne.s32.totalorder %s89, %s90
      %p104 = scmp.eq.s32.totalorder %s35, 1
      %p105 = por %p103, %p104
      %p107 = scmp.ne.s32.totalorder %s90, %s106
      %p108 = scmp.eq.s32.totalorder %s35, 0
      %p109 = por %p107, %p108
      %s110 = ssub.s32 %s29, %s36
      %p111 = scmp.eq.s32.totalorder %s110, 0
      %s113 = sadd.s32 %s112, 1
      %s114 = scalar_select %p111, %s112, %s113
      %p117 = pneg %p111
      %p118 = scmp.eq.s32.totalorder %s29, 1
      %p119 = por %p117, %p118
      %p120 = scmp.ne.s32.totalorder %s112, %s115
      %p121 = scmp.eq.s32.totalorder %s29, 0
      %p122 = por %p120, %p121
      %p123 = scmp.ne.s32.totalorder %s112, %s115
      %p124 = scmp.eq.s32.totalorder %s34, 1
      %p125 = por %p123, %p124
      %p126 = scmp.ne.s32.totalorder %s115, %s116
      %p127 = scmp.eq.s32.totalorder %s34, 0
      %p128 = por %p126, %p127
      %p129 = scmp.ne.s32.totalorder %s115, %s116
      %p130 = scmp.eq.s32.totalorder %s35, 1
      %p131 = por %p129, %p130
      %p133 = scmp.ne.s32.totalorder %s116, %s132
      %p134 = scmp.eq.s32.totalorder %s35, 0
      %p135 = por %p133, %p134
      %s136 = ssub.s32 %s29, %s36
      %p137 = scmp.eq.s32.totalorder %s136, 0
      %s139 = sadd.s32 %s138, 1
      %s140 = scalar_select %p137, %s138, %s139
      %p143 = pneg %p137
      %p144 = scmp.eq.s32.totalorder %s29, 1
      %p145 = por %p143, %p144
      %p146 = scmp.ne.s32.totalorder %s138, %s141
      %p147 = scmp.eq.s32.totalorder %s29, 0
      %p148 = por %p146, %p147
      %p149 = scmp.ne.s32.totalorder %s138, %s141
      %p150 = scmp.eq.s32.totalorder %s34, 1
      %p151 = por %p149, %p150
      %p152 = scmp.ne.s32.totalorder %s141, %s142
      %p153 = scmp.eq.s32.totalorder %s34, 0
      %p154 = por %p152, %p153
      %p155 = scmp.ne.s32.totalorder %s141, %s142
      %p156 = scmp.eq.s32.totalorder %s35, 1
      %p157 = por %p155, %p156
      %p159 = scmp.ne.s32.totalorder %s142, %s158
      %p160 = scmp.eq.s32.totalorder %s35, 0
      %p161 = por %p159, %p160
      %s162 = ssub.s32 %s29, %s36
      %p163 = scmp.eq.s32.totalorder %s162, 0
      %s165 = sadd.s32 %s164, 1
      %s166 = scalar_select %p163, %s164, %s165
      %p169 = pneg %p163
      %p170 = scmp.eq.s32.totalorder %s29, 1
      %p171 = por %p169, %p170
      %p172 = scmp.ne.s32.totalorder %s164, %s167
      %p173 = scmp.eq.s32.totalorder %s29, 0
      %p174 = por %p172, %p173
      %p175 = scmp.ne.s32.totalorder %s164, %s167
      %p176 = scmp.eq.s32.totalorder %s34, 1
      %p177 = por %p175, %p176
      %p178 = scmp.ne.s32.totalorder %s167, %s168
      %p179 = scmp.eq.s32.totalorder %s34, 0
      %p180 = por %p178, %p179
      %p181 = scmp.ne.s32.totalorder %s167, %s168
      %p182 = scmp.eq.s32.totalorder %s35, 1
      %p183 = por %p181, %p182
      %p185 = scmp.ne.s32.totalorder %s168, %s184
      %p186 = scmp.eq.s32.totalorder %s35, 0
      %p187 = por %p185, %p186
      %s188 = ssub.s32 %s29, %s36
      %p189 = scmp.eq.s32.totalorder %s188, 0
      %s191 = sadd.s32 %s190, 1
      %s192 = scalar_select %p189, %s190, %s191
      %p195 = pneg %p189
      %p196 = scmp.eq.s32.totalorder %s29, 1
      %p197 = por %p195, %p196
      %p198 = scmp.ne.s32.totalorder %s190, %s193
      %p199 = scmp.eq.s32.totalorder %s29, 0
      %p200 = por %p198, %p199
      %p201 = scmp.ne.s32.totalorder %s190, %s193
      %p202 = scmp.eq.s32.totalorder %s34, 1
      %p203 = por %p201, %p202
      %p204 = scmp.ne.s32.totalorder %s193, %s194
      %p205 = scmp.eq.s32.totalorder %s34, 0
      %p206 = por %p204, %p205
      %p207 = scmp.ne.s32.totalorder %s193, %s194
      %p208 = scmp.eq.s32.totalorder %s35, 1
      %p209 = por %p207, %p208
      %p211 = scmp.ne.s32.totalorder %s194, %s210
      %p212 = scmp.eq.s32.totalorder %s35, 0
      %p213 = por %p211, %p212
      %s214 = ssub.s32 %s29, %s36
      %p215 = scmp.eq.s32.totalorder %s214, 0
      %s217 = sadd.s32 %s216, 1
      %s218 = scalar_select %p215, %s216, %s217
      %p221 = pneg %p215
      %p222 = scmp.eq.s32.totalorder %s29, 1
      %p223 = por %p221, %p222
      %p224 = scmp.ne.s32.totalorder %s216, %s219
      %p225 = scmp.eq.s32.totalorder %s29, 0
      %p226 = por %p224, %p225
      %p227 = scmp.ne.s32.totalorder %s216, %s219
      %p228 = scmp.eq.s32.totalorder %s34, 1
      %p229 = por %p227, %p228
      %p230 = scmp.ne.s32.totalorder %s219, %s220
      %p231 = scmp.eq.s32.totalorder %s34, 0
      %p232 = por %p230, %p231
      %p233 = scmp.ne.s32.totalorder %s219, %s220
      %p234 = scmp.eq.s32.totalorder %s35, 1
      %p235 = por %p233, %p234
      %p237 = scmp.ne.s32.totalorder %s220, %s236
      %p238 = scmp.eq.s32.totalorder %s35, 0
      %p239 = por %p237, %p238
      %s240 = ssub.s32 %s29, %s36
      %p241 = scmp.eq.s32.totalorder %s240, 0
      %s243 = sadd.s32 %s242, 1
      %s244 = scalar_select %p241, %s242, %s243
      %p247 = pneg %p241
      %p248 = scmp.eq.s32.totalorder %s29, 1
      %p249 = por %p247, %p248
      %p250 = scmp.ne.s32.totalorder %s242, %s245
      %p251 = scmp.eq.s32.totalorder %s29, 0
      %p252 = por %p250, %p251
      %p253 = scmp.ne.s32.totalorder %s242, %s245
      %p254 = scmp.eq.s32.totalorder %s34, 1
      %p255 = por %p253, %p254
      %p256 = scmp.ne.s32.totalorder %s245, %s246
      %p257 = scmp.eq.s32.totalorder %s34, 0
      %p258 = por %p256, %p257
      %p259 = scmp.ne.s32.totalorder %s245, %s246
      %p260 = scmp.eq.s32.totalorder %s35, 1
      %p261 = por %p259, %p260
      %p263 = scmp.ne.s32.totalorder %s246, %s262
      %p264 = scmp.eq.s32.totalorder %s35, 0
      %p265 = por %p263, %p264
      %s266 = ssub.s32 %s29, %s36
      %p267 = scmp.eq.s32.totalorder %s266, 0
      %s269 = sadd.s32 %s268, 1
      %s270 = scalar_select %p267, %s268, %s269
      %p273 = pneg %p267
      %p274 = scmp.eq.s32.totalorder %s29, 1
      %p275 = por %p273, %p274
      %p276 = scmp.ne.s32.totalorder %s268, %s271
      %p277 = scmp.eq.s32.totalorder %s29, 0
      %p278 = por %p276, %p277
      %p279 = scmp.ne.s32.totalorder %s268, %s271
      %p280 = scmp.eq.s32.totalorder %s34, 1
      %p281 = por %p279, %p280
      %p282 = scmp.ne.s32.totalorder %s271, %s272
      %p283 = scmp.eq.s32.totalorder %s34, 0
      %p284 = por %p282, %p283
      %p285 = scmp.ne.s32.totalorder %s271, %s272
      %p286 = scmp.eq.s32.totalorder %s35, 1
      %p287 = por %p285, %p286
      %p289 = scmp.ne.s32.totalorder %s272, %s288
      %p290 = scmp.eq.s32.totalorder %s35, 0
      %p291 = por %p289, %p290
      %s292 = ssub.s32 %s29, %s36
      %p293 = scmp.eq.s32.totalorder %s292, 0
      %s295 = sadd.s32 %s294, 1
      %s296 = scalar_select %p293, %s294, %s295
      %p299 = pneg %p293
      %p300 = scmp.eq.s32.totalorder %s29, 1
      %p301 = por %p299, %p300
      %p302 = scmp.ne.s32.totalorder %s294, %s297
      %p303 = scmp.eq.s32.totalorder %s29, 0
      %p304 = por %p302, %p303
      %p305 = scmp.ne.s32.totalorder %s294, %s297
      %p306 = scmp.eq.s32.totalorder %s34, 1
      %p307 = por %p305, %p306
      %p308 = scmp.ne.s32.totalorder %s297, %s298
      %p309 = scmp.eq.s32.totalorder %s34, 0
      %p310 = por %p308, %p309
      %p311 = scmp.ne.s32.totalorder %s297, %s298
      %p312 = scmp.eq.s32.totalorder %s35, 1
      %p313 = por %p311, %p312
      %p315 = scmp.ne.s32.totalorder %s298, %s314
      %p316 = scmp.eq.s32.totalorder %s35, 0
      %p317 = por %p315, %p316
      %p318 = scmp.le.s32.totalorder 1, %s29
      %p319 = scmp.lt.s32.totalorder %s29, 3
      %p320 = pnand %p318, %p319
      %p321 = pneg %p320
      // Predicated region
      $region9: #{tpu_custom_call.1} parent=5 // pred_check
        _
      $region10: #{tpu_custom_call.1} parent=5 // pred_check_branch
        %323 = sbr.rel (%p320) target = $region12
      $region11: #{tpu_custom_call.1} parent=5 // pred_region
        %s324 = ssub.s32 %s29, 1
        // Predicated region
        $region13: #{tpu_custom_call.1} parent=11 // pred_check
          %p325 = pneg %p50
        $region14: #{tpu_custom_call.1} parent=11 // pred_check_branch
          %327 = sbr.rel (%p325) target = $region16
        $region15: #{tpu_custom_call.1} parent=11 // pred_region
          %329 = vsyncadd [#allocation4], 0
          %s330 = sshll.u32 %s0, 4
          %s331 = int_to_ptr.hbm [resolvable:$true] %s330
          %s332 = sshll.u32 [#allocation3], 4
          %s333 = int_to_ptr.vmem [resolvable:$true] %s332
          %338 = dma.hbm_to_vmem [thread:$0]  %s331, 2048, %s333, [#allocation4], 64, 64, 4
        $region16: #{tpu_custom_call.1} parent=11 // pred_fallthru
          _
      $region12: #{tpu_custom_call.1} parent=5 // pred_fallthru
        _
      %p339 = scmp.lt.s32.totalorder %s29, 2
      // Predicated region
      $region17: #{tpu_custom_call.1} parent=5 // pred_check
        %p340 = pneg %p339
      $region18: #{tpu_custom_call.1} parent=5 // pred_check_branch
        %342 = sbr.rel (%p340) target = $region20
      $region19: #{tpu_custom_call.1} parent=5 // pred_region
        // Predicated region
        $region21: #{tpu_custom_call.1} parent=19 // pred_check
          %p343 = pneg %p70
        $region22: #{tpu_custom_call.1} parent=19 // pred_check_branch
          %345 = sbr.rel (%p343) target = $region24
        $region23: #{tpu_custom_call.1} parent=19 // pred_region
          %p346 = scmp.lt.s32.totalorder %s29, 1
          %s347 = scalar_select %p346, %s29, 1
          %s348 = smul.addr %s347, 8
          %s349 = scalar_lea.vmem %s1, %s348
        $region24: #{tpu_custom_call.1} parent=19 // pred_fallthru
          _
        // Predicated region
        $region25: #{tpu_custom_call.1} parent=19 // pred_check
          %p350 = pneg %p96
        $region26: #{tpu_custom_call.1} parent=19 // pred_check_branch
          %352 = sbr.rel (%p350) target = $region28
        $region27: #{tpu_custom_call.1} parent=19 // pred_region
          %p353 = scmp.lt.s32.totalorder %s29, 1
          %s354 = scalar_select %p353, %s29, 1
          %s355 = smul.addr %s354, 8
          %s356 = scalar_lea.vmem %s2, %s355
        $region28: #{tpu_custom_call.1} parent=19 // pred_fallthru
          _
        // Predicated region
        $region29: #{tpu_custom_call.1} parent=19 // pred_check
          %p357 = pneg %p122
        $region30: #{tpu_custom_call.1} parent=19 // pred_check_branch
          %359 = sbr.rel (%p357) target = $region32
        $region31: #{tpu_custom_call.1} parent=19 // pred_region
          %s360 = sand.u32 %s29, 1
          %s361 = scalar_lea.sflag [#allocation7], %s360
          %s362 = sand.u32 %s112, 1
          %s363 = smul.addr %s362, 8
          %s364 = scalar_lea.vmem [#allocation6], %s363
          %366 = vsyncadd %s361, 0
          %s367 = smul.addr %s29, 8
          %s368 = scalar_lea.hbm %s3, %s367
          %s370 = sshll.u32 %s368, 4
          %s371 = int_to_ptr.hbm [resolvable:$true] %s370
          %s372 = sshll.u32 %s364, 4
          %s373 = int_to_ptr.vmem [resolvable:$true] %s372
          %375 = dma.hbm_to_vmem [thread:$0]  %s371, 128, %s373, %s361
        $region32: #{tpu_custom_call.1} parent=19 // pred_fallthru
          _
        // Predicated region
        $region33: #{tpu_custom_call.1} parent=19 // pred_check
          %p376 = pneg %p148
        $region34: #{tpu_custom_call.1} parent=19 // pred_check_branch
          %378 = sbr.rel (%p376) target = $region36
        $region35: #{tpu_custom_call.1} parent=19 // pred_region
          %s379 = sand.u32 %s29, 1
          %s380 = scalar_lea.sflag [#allocation7], %s379
          %s381 = sand.u32 %s138, 1
          %s382 = smul.addr %s381, 8
          %s383 = scalar_lea.vmem [#allocation8], %s382
          %385 = vsyncadd %s380, 0
          %s386 = smul.addr %s29, 8
          %s387 = scalar_lea.hbm %s4, %s386
          %s389 = sshll.u32 %s387, 4
          %s390 = int_to_ptr.hbm [resolvable:$true] %s389
          %s391 = sshll.u32 %s383, 4
          %s392 = int_to_ptr.vmem [resolvable:$true] %s391
          %394 = dma.hbm_to_vmem [thread:$0]  %s390, 128, %s392, %s380
        $region36: #{tpu_custom_call.1} parent=19 // pred_fallthru
          _
        // Predicated region
        $region37: #{tpu_custom_call.1} parent=19 // pred_check
          %p395 = pneg %p174
        $region38: #{tpu_custom_call.1} parent=19 // pred_check_branch
          %397 = sbr.rel (%p395) target = $region40
        $region39: #{tpu_custom_call.1} parent=19 // pred_region
          %s398 = sand.u32 %s29, 1
          %s399 = scalar_lea.sflag [#allocation10], %s398
          %s400 = sand.u32 %s164, 1
          %s401 = smul.addr %s400, 8
          %s402 = scalar_lea.vmem [#allocation9], %s401
          %404 = vsyncadd %s399, 0
          %s405 = smul.addr %s29, 8
          %s406 = scalar_lea.hbm %s5, %s405
          %s408 = sshll.u32 %s406, 4
          %s409 = int_to_ptr.hbm [resolvable:$true] %s408
          %s410 = sshll.u32 %s402, 4
          %s411 = int_to_ptr.vmem [resolvable:$true] %s410
          %413 = dma.hbm_to_vmem [thread:$0]  %s409, 128, %s411, %s399
        $region40: #{tpu_custom_call.1} parent=19 // pred_fallthru
          _
        // Predicated region
        $region41: #{tpu_custom_call.1} parent=19 // pred_check
          %p414 = pneg %p200
        $region42: #{tpu_custom_call.1} parent=19 // pred_check_branch
          %416 = sbr.rel (%p414) target = $region44
        $region43: #{tpu_custom_call.1} parent=19 // pred_region
          %s417 = sand.u32 %s29, 1
          %s418 = scalar_lea.sflag [#allocation10], %s417
          %s419 = sand.u32 %s190, 1
          %s420 = smul.addr %s419, 8
          %s421 = scalar_lea.vmem [#allocation11], %s420
          %423 = vsyncadd %s418, 0
          %s424 = smul.addr %s29, 8
          %s425 = scalar_lea.hbm %s6, %s424
          %s427 = sshll.u32 %s425, 4
          %s428 = int_to_ptr.hbm [resolvable:$true] %s427
          %s429 = sshll.u32 %s421, 4
          %s430 = int_to_ptr.vmem [resolvable:$true] %s429
          %432 = dma.hbm_to_vmem [thread:$0]  %s428, 128, %s430, %s418
        $region44: #{tpu_custom_call.1} parent=19 // pred_fallthru
          _
        // Predicated region
        $region45: #{tpu_custom_call.1} parent=19 // pred_check
          %p433 = pneg %p226
        $region46: #{tpu_custom_call.1} parent=19 // pred_check_branch
          %435 = sbr.rel (%p433) target = $region48
        $region47: #{tpu_custom_call.1} parent=19 // pred_region
          %s436 = sand.u32 %s29, 1
          %s437 = scalar_lea.sflag [#allocation13], %s436
          %s438 = sand.u32 %s216, 1
          %s439 = smul.addr %s438, 8
          %s440 = scalar_lea.vmem [#allocation12], %s439
          %442 = vsyncadd %s437, 0
          %s443 = smul.addr %s29, 8
          %s444 = scalar_lea.hbm %s7, %s443
          %s446 = sshll.u32 %s444, 4
          %s447 = int_to_ptr.hbm [resolvable:$true] %s446
          %s448 = sshll.u32 %s440, 4
          %s449 = int_to_ptr.vmem [resolvable:$true] %s448
          %451 = dma.hbm_to_vmem [thread:$0]  %s447, 128, %s449, %s437
        $region48: #{tpu_custom_call.1} parent=19 // pred_fallthru
          _
        // Predicated region
        $region49: #{tpu_custom_call.1} parent=19 // pred_check
          %p452 = pneg %p252
        $region50: #{tpu_custom_call.1} parent=19 // pred_check_branch
          %454 = sbr.rel (%p452) target = $region52
        $region51: #{tpu_custom_call.1} parent=19 // pred_region
          %s455 = sand.u32 %s29, 1
          %s456 = scalar_lea.sflag [#allocation13], %s455
          %s457 = sand.u32 %s242, 1
          %s458 = smul.addr %s457, 8
          %s459 = scalar_lea.vmem [#allocation14], %s458
          %461 = vsyncadd %s456, 0
          %s462 = smul.addr %s29, 8
          %s463 = scalar_lea.hbm %s8, %s462
          %s465 = sshll.u32 %s463, 4
          %s466 = int_to_ptr.hbm [resolvable:$true] %s465
          %s467 = sshll.u32 %s459, 4
          %s468 = int_to_ptr.vmem [resolvable:$true] %s467
          %470 = dma.hbm_to_vmem [thread:$0]  %s466, 128, %s468, %s456
        $region52: #{tpu_custom_call.1} parent=19 // pred_fallthru
          _
        // Predicated region
        $region53: #{tpu_custom_call.1} parent=19 // pred_check
          %p471 = pneg %p278
        $region54: #{tpu_custom_call.1} parent=19 // pred_check_branch
          %473 = sbr.rel (%p471) target = $region56
        $region55: #{tpu_custom_call.1} parent=19 // pred_region
          %p474 = scmp.lt.s32.totalorder %s29, 1
          %s475 = scalar_select %p474, %s29, 1
          %s476 = smul.addr %s475, 8
          %s477 = scalar_lea.vmem %s9, %s476
        $region56: #{tpu_custom_call.1} parent=19 // pred_fallthru
          _
      $region20: #{tpu_custom_call.1} parent=5 // pred_fallthru
        _
      %p478 = scmp.le.s32.totalorder 1, %s29
      %p479 = scmp.lt.s32.totalorder %s29, 3
      %p480 = pnand %p478, %p479
      %p481 = pneg %p480
      // Predicated region
      $region57: #{tpu_custom_call.1} parent=5 // pred_check
        _
      $region58: #{tpu_custom_call.1} parent=5 // pred_check_branch
        %483 = sbr.rel (%p480) target = $region60
      $region59: #{tpu_custom_call.1} parent=5 // pred_region
        %s484 = ssub.s32 %s29, 1
        // Predicated region
        $region61: #{tpu_custom_call.1} parent=59 // pred_check
          %p485 = pneg %p50
        $region62: #{tpu_custom_call.1} parent=59 // pred_check_branch
          %487 = sbr.rel (%p485) target = $region64
        $region63: #{tpu_custom_call.1} parent=59 // pred_region
          %489 = dma.done [#allocation4], 2048
        $region64: #{tpu_custom_call.1} parent=59 // pred_fallthru
          _
        %s490 = sand.u32 %s34, 1
        %s491 = scalar_lea.sflag [#allocation7], %s490
        %s492 = sand.u32 %s115, 1
        %s493 = smul.addr %s492, 8
        %s494 = scalar_lea.vmem [#allocation6], %s493
        // Predicated region
        $region65: #{tpu_custom_call.1} parent=59 // pred_check
          %p495 = pneg %p128
        $region66: #{tpu_custom_call.1} parent=59 // pred_check_branch
          %497 = sbr.rel (%p495) target = $region68
        $region67: #{tpu_custom_call.1} parent=59 // pred_region
          %499 = dma.done %s491, 128
        $region68: #{tpu_custom_call.1} parent=59 // pred_fallthru
          _
        %s500 = sand.u32 %s34, 1
        %s501 = scalar_lea.sflag [#allocation7], %s500
        %s502 = sand.u32 %s141, 1
        %s503 = smul.addr %s502, 8
        %s504 = scalar_lea.vmem [#allocation8], %s503
        // Predicated region
        $region69: #{tpu_custom_call.1} parent=59 // pred_check
          %p505 = pneg %p154
        $region70: #{tpu_custom_call.1} parent=59 // pred_check_branch
          %507 = sbr.rel (%p505) target = $region72
        $region71: #{tpu_custom_call.1} parent=59 // pred_region
          %509 = dma.done %s501, 128
        $region72: #{tpu_custom_call.1} parent=59 // pred_fallthru
          _
        %s510 = sand.u32 %s34, 1
        %s511 = scalar_lea.sflag [#allocation10], %s510
        %s512 = sand.u32 %s167, 1
        %s513 = smul.addr %s512, 8
        %s514 = scalar_lea.vmem [#allocation9], %s513
        // Predicated region
        $region73: #{tpu_custom_call.1} parent=59 // pred_check
          %p515 = pneg %p180
        $region74: #{tpu_custom_call.1} parent=59 // pred_check_branch
          %517 = sbr.rel (%p515) target = $region76
        $region75: #{tpu_custom_call.1} parent=59 // pred_region
          %519 = dma.done %s511, 128
        $region76: #{tpu_custom_call.1} parent=59 // pred_fallthru
          _
        %s520 = sand.u32 %s34, 1
        %s521 = scalar_lea.sflag [#allocation10], %s520
        %s522 = sand.u32 %s193, 1
        %s523 = smul.addr %s522, 8
        %s524 = scalar_lea.vmem [#allocation11], %s523
        // Predicated region
        $region77: #{tpu_custom_call.1} parent=59 // pred_check
          %p525 = pneg %p206
        $region78: #{tpu_custom_call.1} parent=59 // pred_check_branch
          %527 = sbr.rel (%p525) target = $region80
        $region79: #{tpu_custom_call.1} parent=59 // pred_region
          %529 = dma.done %s521, 128
        $region80: #{tpu_custom_call.1} parent=59 // pred_fallthru
          _
        %s530 = sand.u32 %s34, 1
        %s531 = scalar_lea.sflag [#allocation13], %s530
        %s532 = sand.u32 %s219, 1
        %s533 = smul.addr %s532, 8
        %s534 = scalar_lea.vmem [#allocation12], %s533
        // Predicated region
        $region81: #{tpu_custom_call.1} parent=59 // pred_check
          %p535 = pneg %p232
        $region82: #{tpu_custom_call.1} parent=59 // pred_check_branch
          %537 = sbr.rel (%p535) target = $region84
        $region83: #{tpu_custom_call.1} parent=59 // pred_region
          %539 = dma.done %s531, 128
        $region84: #{tpu_custom_call.1} parent=59 // pred_fallthru
          _
        %s540 = sand.u32 %s34, 1
        %s541 = scalar_lea.sflag [#allocation13], %s540
        %s542 = sand.u32 %s245, 1
        %s543 = smul.addr %s542, 8
        %s544 = scalar_lea.vmem [#allocation14], %s543
        // Predicated region
        $region85: #{tpu_custom_call.1} parent=59 // pred_check
          %p545 = pneg %p258
        $region86: #{tpu_custom_call.1} parent=59 // pred_check_branch
          %547 = sbr.rel (%p545) target = $region88
        $region87: #{tpu_custom_call.1} parent=59 // pred_region
          %549 = dma.done %s541, 128
        $region88: #{tpu_custom_call.1} parent=59 // pred_fallthru
          _
        %p550 = pneg %p50
        %p551 = pneg %p47
        %p552 = scmp.lt.s32.totalorder %s34, 1
        %s553 = scalar_select %p552, %s34, 1
        %s554 = smul.addr %s553, 8
        %s555 = scalar_lea.vmem %s1, %s554
        %p556 = pneg %p76
        %p557 = pneg %p73
        %p558 = scmp.lt.s32.totalorder %s34, 1
        %s559 = scalar_select %p558, %s34, 1
        %s560 = smul.addr %s559, 8
        %s561 = scalar_lea.vmem %s2, %s560
        %p562 = pneg %p102
        %p563 = pneg %p99
        %s564 = sand.u32 %s34, 1
        %s565 = scalar_lea.sflag [#allocation7], %s564
        %s566 = sand.u32 %s115, 1
        %s567 = smul.addr %s566, 8
        %s568 = scalar_lea.vmem [#allocation6], %s567
        %p569 = pneg %p128
        %p570 = pneg %p125
        %s571 = sand.u32 %s34, 1
        %s572 = scalar_lea.sflag [#allocation7], %s571
        %s573 = sand.u32 %s141, 1
        %s574 = smul.addr %s573, 8
        %s575 = scalar_lea.vmem [#allocation8], %s574
        %p576 = pneg %p154
        %p577 = pneg %p151
        %s578 = sand.u32 %s34, 1
        %s579 = scalar_lea.sflag [#allocation10], %s578
        %s580 = sand.u32 %s167, 1
        %s581 = smul.addr %s580, 8
        %s582 = scalar_lea.vmem [#allocation9], %s581
        %p583 = pneg %p180
        %p584 = pneg %p177
        %s585 = sand.u32 %s34, 1
        %s586 = scalar_lea.sflag [#allocation10], %s585
        %s587 = sand.u32 %s193, 1
        %s588 = smul.addr %s587, 8
        %s589 = scalar_lea.vmem [#allocation11], %s588
        %p590 = pneg %p206
        %p591 = pneg %p203
        %s592 = sand.u32 %s34, 1
        %s593 = scalar_lea.sflag [#allocation13], %s592
        %s594 = sand.u32 %s219, 1
        %s595 = smul.addr %s594, 8
        %s596 = scalar_lea.vmem [#allocation12], %s595
        %p597 = pneg %p232
        %p598 = pneg %p229
        %s599 = sand.u32 %s34, 1
        %s600 = scalar_lea.sflag [#allocation13], %s599
        %s601 = sand.u32 %s245, 1
        %s602 = smul.addr %s601, 8
        %s603 = scalar_lea.vmem [#allocation14], %s602
        %p604 = pneg %p258
        %p605 = pneg %p255
        %p606 = scmp.lt.s32.totalorder %s34, 1
        %s607 = scalar_select %p606, %s34, 1
        %s608 = smul.addr %s607, 8
        %s609 = scalar_lea.vmem %s9, %s608
        %p610 = pneg %p284
        %p611 = pneg %p281
        %p612 = pneg %p310
        %p613 = pneg %p307
        %s614 = sand.u32 %s297, 1
        %s615 = scalar_lea.sflag [#allocation5], %s614
        %s616 = sand.u32 %s297, 1
        %s617 = smul.addr %s616, 8
        %s618 = scalar_lea.vmem [#allocation15], %s617
        %p619 = scmp.lt.s32.totalorder %s34, 1
        %s620 = scalar_select %p619, %s34, 1
        %s621 = smul.addr %s620, 8
        %s622 = scalar_lea.vmem %s1, %s621
        %p623 = scmp.lt.s32.totalorder %s34, 1
        %s624 = scalar_select %p623, %s34, 1
        %s625 = smul.addr %s624, 8
        %s626 = scalar_lea.vmem %s2, %s625
        %p627 = scmp.lt.s32.totalorder %s34, 1
        %s628 = scalar_select %p627, %s34, 1
        %s629 = smul.addr %s628, 8
        %s630 = scalar_lea.vmem %s9, %s629
        %v631 = vld [vmem:[%s622] sm:$0xff]
        %vm632 = vcmask 39936
        %v633 = vsel %vm632, %v631, -inf
        %634 = vmax.xlane.f32.xlu0 %v633
        %v635 = vpop.xlane.xlu0 %634
        %v636 = vsub.f32 %v631, %v635
        %v637 = vmul.f32 %v636, 1.442695
        %v638 = vpow.pop %v637
        %v639 = vsel %vm632, %v638, 0.0
        %640 = vadd.xlane.f32.xlu0 %v639
        %v641 = vpop.xlane.xlu0 %640
        %v642 = vrcp.pop %v641
        %v643 = vsub.f32 0.0, %v642
        %v644 = vmul.f32 %v638, %v643
        %v645 = vpack.c.bf16 %v644, %v644
        %vm646 = vcmask 35840
        %647 = vst.msk [vmem:[#allocation2] sm:$0xf] %vm646, %v645
        %v648 = vld [vmem:[%s626] sm:$0xff]
        %vm649 = vcmask 130048
        %v650 = vsel %vm649, %v648, -inf
        %651 = vmax.xlane.f32.xlu0 %v650
        %v652 = vpop.xlane.xlu0 %651
        %v653 = vsub.f32 %v648, %v652
        %v654 = vmul.f32 %v653, 1.442695
        %v655 = vpow.pop %v654
        %v656 = vsel %vm649, %v655, 0.0
        %657 = vadd.xlane.f32.xlu0 %v656
        %v658 = vpop.xlane.xlu0 %657
        %v659 = vrcp.pop %v658
        %v660 = vsub.f32 0.0, %v659
        %v661 = vmul.f32 %v655, %v660
        %v662 = vpack.c.bf16 %v661, %v661
        %664 = vrot.lane.b32.xlu0 %v662, 5
        %v665 = vpop.permute.xlu0 %664
        %vm667 = vcmask 166952
        %668 = vst.msk [vmem:[#allocation2] sm:$0xf] %vm667, %v665
        %v669 = vld [vmem:[%s494] sm:$0xff]
        %v670 = vsel %vm649, %v669, -inf
        %671 = vmax.xlane.f32.xlu0 %v670
        %v672 = vpop.xlane.xlu0 %671
        %v673 = vsub.f32 %v669, %v672
        %v674 = vmul.f32 %v673, 1.442695
        %v675 = vpow.pop %v674
        %v676 = vsel %vm649, %v675, 0.0
        %677 = vadd.xlane.f32.xlu0 %v676
        %v678 = vpop.xlane.xlu0 %677
        %v679 = vrcp.pop %v678
        %v680 = vsub.f32 0.0, %v679
        %v681 = vmul.f32 %v675, %v680
        %v682 = vpack.c.bf16 %v681, %v681
        %684 = vrot.lane.b32.xlu0 %v682, 21
        %v685 = vpop.permute.xlu0 %684
        %vm687 = vcmask 298152
        %688 = vst.msk [vmem:[#allocation2] sm:$0xf] %vm687, %v685
        %v689 = vld [vmem:[%s504] sm:$0xff]
        %v690 = vsel %vm649, %v689, -inf
        %691 = vmax.xlane.f32.xlu0 %v690
        %v692 = vpop.xlane.xlu0 %691
        %v693 = vsub.f32 %v689, %v692
        %v694 = vmul.f32 %v693, 1.442695
        %v695 = vpow.pop %v694
        %v696 = vsel %vm649, %v695, 0.0
        %697 = vadd.xlane.f32.xlu0 %v696
        %v698 = vpop.xlane.xlu0 %697
        %v699 = vrcp.pop %v698
        %v700 = vsub.f32 0.0, %v699
        %v701 = vmul.f32 %v695, %v700
        %v702 = vpack.c.bf16 %v701, %v701
        %704 = vrot.lane.b32.xlu0 %v702, 37
        %v705 = vpop.permute.xlu0 %704
        %vm707 = vcmask 429352
        %708 = vst.msk [vmem:[#allocation2] sm:$0xf] %vm707, %v705
        %v709 = vld [vmem:[%s514] sm:$0xff]
        %v710 = vsel %vm649, %v709, -inf
        %711 = vmax.xlane.f32.xlu0 %v710
        %v712 = vpop.xlane.xlu0 %711
        %v713 = vsub.f32 %v709, %v712
        %v714 = vmul.f32 %v713, 1.442695
        %v715 = vpow.pop %v714
        %v716 = vsel %vm649, %v715, 0.0
        %717 = vadd.xlane.f32.xlu0 %v716
        %v718 = vpop.xlane.xlu0 %717
        %v719 = vrcp.pop %v718
        %v720 = vsub.f32 0.0, %v719
        %v721 = vmul.f32 %v715, %v720
        %v722 = vpack.c.bf16 %v721, %v721
        %724 = vrot.lane.b32.xlu0 %v722, 53
        %v725 = vpop.permute.xlu0 %724
        %vm727 = vcmask 560552
        %728 = vst.msk [vmem:[#allocation2] sm:$0xf] %vm727, %v725
        %v729 = vld [vmem:[%s524] sm:$0xff]
        %v730 = vsel %vm649, %v729, -inf
        %731 = vmax.xlane.f32.xlu0 %v730
        %v732 = vpop.xlane.xlu0 %731
        %v733 = vsub.f32 %v729, %v732
        %v734 = vmul.f32 %v733, 1.442695
        %v735 = vpow.pop %v734
        %v736 = vsel %vm649, %v735, 0.0
        %737 = vadd.xlane.f32.xlu0 %v736
        %v738 = vpop.xlane.xlu0 %737
        %v739 = vrcp.pop %v738
        %v740 = vsub.f32 0.0, %v739
        %v741 = vmul.f32 %v735, %v740
        %v742 = vpack.c.bf16 %v741, %v741
        %744 = vrot.lane.b32.xlu0 %v742, 69
        %v745 = vpop.permute.xlu0 %744
        %vm747 = vcmask 691752
        %748 = vst.msk [vmem:[#allocation2] sm:$0xf] %vm747, %v745
        %v749 = vld [vmem:[%s534] sm:$0xff]
        %v750 = vsel %vm649, %v749, -inf
        %751 = vmax.xlane.f32.xlu0 %v750
        %v752 = vpop.xlane.xlu0 %751
        %v753 = vsub.f32 %v749, %v752
        %v754 = vmul.f32 %v753, 1.442695
        %v755 = vpow.pop %v754
        %v756 = vsel %vm649, %v755, 0.0
        %757 = vadd.xlane.f32.xlu0 %v756
        %v758 = vpop.xlane.xlu0 %757
        %v759 = vrcp.pop %v758
        %v760 = vsub.f32 0.0, %v759
        %v761 = vmul.f32 %v755, %v760
        %v762 = vpack.c.bf16 %v761, %v761
        %764 = vrot.lane.b32.xlu0 %v762, 85
        %v765 = vpop.permute.xlu0 %764
        %vm767 = vcmask 822952
        %768 = vst.msk [vmem:[#allocation2] sm:$0xf] %vm767, %v765
        %v769 = vld [vmem:[%s544] sm:$0xff]
        %v770 = vsel %vm649, %v769, -inf
        %771 = vmax.xlane.f32.xlu0 %v770
        %v772 = vpop.xlane.xlu0 %771
        %v773 = vsub.f32 %v769, %v772
        %v774 = vmul.f32 %v773, 1.442695
        %v775 = vpow.pop %v774
        %v776 = vsel %vm649, %v775, 0.0
        %777 = vadd.xlane.f32.xlu0 %v776
        %v778 = vpop.xlane.xlu0 %777
        %v779 = vrcp.pop %v778
        %v780 = vsub.f32 0.0, %v779
        %v781 = vmul.f32 %v775, %v780
        %v782 = vpack.c.bf16 %v781, %v781
        %784 = vrot.lane.b32.xlu0 %v782, 101
        %v785 = vpop.permute.xlu0 %784
        %vm787 = vcmask 954152
        %788 = vst.msk [vmem:[#allocation2] sm:$0xf] %vm787, %v785
        %v789 = vld [vmem:[%s630] sm:$0xff]
        %v790 = vsel %vm649, %v789, -inf
        %791 = vmax.xlane.f32.xlu0 %v790
        %v792 = vpop.xlane.xlu0 %791
        %v793 = vsub.f32 %v789, %v792
        %v794 = vmul.f32 %v793, 1.442695
        %v795 = vpow.pop %v794
        %v796 = vsel %vm649, %v795, 0.0
        %797 = vadd.xlane.f32.xlu0 %v796
        %v798 = vpop.xlane.xlu0 %797
        %v799 = vrcp.pop %v798
        %v800 = vsub.f32 0.0, %v799
        %v801 = vmul.f32 %v795, %v800
        %v802 = vsel %vm649, %v801, 0.0
        %v803 = vpack.c.bf16 0.0, %v802
        %805 = vrot.lane.b32.xlu0 %v803, 117
        %v806 = vpop.permute.xlu0 %805
        %v807 = vrot.slane %v806, 4
        %vm808 = vcmask 957440
        %v809 = vsel %vm808, %v807, %v806
        %vm811 = vcmask 1044392
        %vm812 = vcmask 1047556
        %vm813 = vmor %vm812, %vm811
        %814 = vst.msk [vmem:[#allocation2] sm:$0xff] %vm813, %v809
        %v815 = vld [vmem:[#allocation2] sm:$0xff]
        %v816 = vld [vmem:[#allocation3] sm:$0xf]
        %v817 = vld [vmem:[#allocation3 + $0x4] sm:$0xf]
        %v818 = vld [vmem:[#allocation3 + $0x8] sm:$0xf]
        %v819 = vld [vmem:[#allocation3 + $0xc] sm:$0xf]
        %v820 = vld [vmem:[#allocation3 + $0x10] sm:$0xf]
        %v821 = vld [vmem:[#allocation3 + $0x14] sm:$0xf]
        %v822 = vld [vmem:[#allocation3 + $0x18] sm:$0xf]
        %v823 = vld [vmem:[#allocation3 + $0x1c] sm:$0xf]
        %v824 = vld [vmem:[#allocation3 + $0x20] sm:$0xf]
        %v825 = vld [vmem:[#allocation3 + $0x24] sm:$0xf]
        %v826 = vld [vmem:[#allocation3 + $0x28] sm:$0xf]
        %v827 = vld [vmem:[#allocation3 + $0x2c] sm:$0xf]
        %v828 = vld [vmem:[#allocation3 + $0x30] sm:$0xf]
        %v829 = vld [vmem:[#allocation3 + $0x34] sm:$0xf]
        %v830 = vld [vmem:[#allocation3 + $0x38] sm:$0xf]
        %v831 = vld [vmem:[#allocation3 + $0x3c] sm:$0xf]
        %v832 = vld [vmem:[#allocation3 + $0x40] sm:$0xf]
        %v833 = vld [vmem:[#allocation3 + $0x44] sm:$0xf]
        %v834 = vld [vmem:[#allocation3 + $0x48] sm:$0xf]
        %v835 = vld [vmem:[#allocation3 + $0x4c] sm:$0xf]
        %v836 = vld [vmem:[#allocation3 + $0x50] sm:$0xf]
        %v837 = vld [vmem:[#allocation3 + $0x54] sm:$0xf]
        %v838 = vld [vmem:[#allocation3 + $0x58] sm:$0xf]
        %v839 = vld [vmem:[#allocation3 + $0x5c] sm:$0xf]
        %v840 = vld [vmem:[#allocation3 + $0x60] sm:$0xf]
        %v841 = vld [vmem:[#allocation3 + $0x64] sm:$0xf]
        %v842 = vld [vmem:[#allocation3 + $0x68] sm:$0xf]
        %v843 = vld [vmem:[#allocation3 + $0x6c] sm:$0xf]
        %v844 = vld [vmem:[#allocation3 + $0x70] sm:$0xf]
        %v845 = vld [vmem:[#allocation3 + $0x74] sm:$0xf]
        %v846 = vld [vmem:[#allocation3 + $0x78] sm:$0xf]
        %v847 = vld [vmem:[#allocation3 + $0x7c] sm:$0xf]
        %v849 = vunpack.c.l.b16 %v815
        %v850 = vunpack.c.h.b16 %v815
        %v851 = vpack.c.b16 %v849, %v849
        %v852 = vpack.c.b16 %v850, %v850
        %v887 = vunpack.c.l.b16 %v816
        %v888 = vunpack.c.l.b16 %v817
        %v889 = vunpack.c.l.b16 %v818
        %v890 = vunpack.c.l.b16 %v819
        %v891 = vunpack.c.l.b16 %v820
        %v892 = vunpack.c.l.b16 %v821
        %v893 = vunpack.c.l.b16 %v822
        %v894 = vunpack.c.l.b16 %v823
        %v895 = vunpack.c.l.b16 %v824
        %v896 = vunpack.c.l.b16 %v825
        %v897 = vunpack.c.l.b16 %v826
        %v898 = vunpack.c.l.b16 %v827
        %v899 = vunpack.c.l.b16 %v828
        %v900 = vunpack.c.l.b16 %v829
        %v901 = vunpack.c.l.b16 %v830
        %v902 = vunpack.c.l.b16 %v831
        %v903 = vunpack.c.l.b16 %v832
        %v904 = vunpack.c.l.b16 %v833
        %v905 = vunpack.c.l.b16 %v834
        %v906 = vunpack.c.l.b16 %v835
        %v907 = vunpack.c.l.b16 %v836
        %v908 = vunpack.c.l.b16 %v837
        %v909 = vunpack.c.l.b16 %v838
        %v910 = vunpack.c.l.b16 %v839
        %v911 = vunpack.c.l.b16 %v840
        %v912 = vunpack.c.l.b16 %v841
        %v913 = vunpack.c.l.b16 %v842
        %v914 = vunpack.c.l.b16 %v843
        %v915 = vunpack.c.l.b16 %v844
        %v916 = vunpack.c.l.b16 %v845
        %v917 = vunpack.c.l.b16 %v846
        %v918 = vunpack.c.l.b16 %v847
        %v919 = vpack.c.b16 %v888, %v887
        %v920 = vpack.c.b16 %v890, %v889
        %v921 = vpack.c.b16 %v892, %v891
        %v922 = vpack.c.b16 %v894, %v893
        %v923 = vpack.c.b16 %v896, %v895
        %v924 = vpack.c.b16 %v898, %v897
        %v925 = vpack.c.b16 %v900, %v899
        %v926 = vpack.c.b16 %v902, %v901
        %v927 = vpack.c.b16 %v904, %v903
        %v928 = vpack.c.b16 %v906, %v905
        %v929 = vpack.c.b16 %v908, %v907
        %v930 = vpack.c.b16 %v910, %v909
        %v931 = vpack.c.b16 %v912, %v911
        %v932 = vpack.c.b16 %v914, %v913
        %v933 = vpack.c.b16 %v916, %v915
        %v934 = vpack.c.b16 %v918, %v917
        %951 = vmatpush.bf16.msra.mxu0 %v926
        %952 = vmatpush.bf16.msra.mxu0 %v925
        %953 = vmatpush.bf16.msra.mxu0 %v924
        %954 = vmatpush.bf16.msra.mxu0 %v923
        %955 = vmatpush.bf16.msra.mxu0 %v922
        %956 = vmatpush.bf16.msra.mxu0 %v921
        %957 = vmatpush.bf16.msra.mxu0 %v920
        %958 = vmatpush.bf16.msra.mxu0 %v919
        %959 = vmatmul.bf16.gmra.mxu0 %v851
        %v960 = vpop.f32.mrf.mxu0
        %v961 = vadd.f32 0.0, %v960
        %v962 = vpop.f32.mrf.mxu0
        %963 = vdwg.mxu0
        %964 = vmatpush.bf16.msra.mxu0 %v934
        %965 = vmatpush.bf16.msra.mxu0 %v933
        %966 = vmatpush.bf16.msra.mxu0 %v932
        %967 = vmatpush.bf16.msra.mxu0 %v931
        %968 = vmatpush.bf16.msra.mxu0 %v930
        %969 = vmatpush.bf16.msra.mxu0 %v929
        %970 = vmatpush.bf16.msra.mxu0 %v928
        %971 = vmatpush.bf16.msra.mxu0 %v927
        %972 = vmatmul.bf16.gmra.mxu0 %v852
        %v973 = vpop.f32.mrf.mxu0
        %v974 = vadd.f32 %v961, %v973
        %v975 = vpop.f32.mrf.mxu0
        %976 = vdwg.mxu0
        %977 = vst [vmem:[%s618] sm:$0xff] %v974
        %s978 = sand.u32 %s297, 1
        %s979 = scalar_lea.sflag [#allocation5], %s978
        %s980 = sand.u32 %s297, 1
        %s981 = smul.addr %s980, 8
        %s982 = scalar_lea.vmem [#allocation15], %s981
        // Predicated region
        $region89: #{tpu_custom_call.1} parent=59 // pred_check
          %p983 = pneg %p307
        $region90: #{tpu_custom_call.1} parent=59 // pred_check_branch
          %985 = sbr.rel (%p983) target = $region92
        $region91: #{tpu_custom_call.1} parent=59 // pred_region
          %987 = vsyncadd %s979, 0
          %s988 = smul.addr %s34, 8
          %s989 = scalar_lea.hbm %s10, %s988
          %s991 = sshll.u32 %s982, 4
          %s992 = int_to_ptr.vmem [resolvable:$true] %s991
          %s993 = sshll.u32 %s989, 4
          %s994 = int_to_ptr.hbm [resolvable:$true] %s993
          %996 = dma.vmem_to_hbm [thread:$0]  %s992, 128, %s994, %s979
        $region92: #{tpu_custom_call.1} parent=59 // pred_fallthru
          _
      $region60: #{tpu_custom_call.1} parent=5 // pred_fallthru
        _
      %p997 = scmp.le.s32.totalorder 2, %s29
      // Predicated region
      $region93: #{tpu_custom_call.1} parent=5 // pred_check
        %p998 = pneg %p997
      $region94: #{tpu_custom_call.1} parent=5 // pred_check_branch
        %1000 = sbr.rel (%p998) target = $region96
      $region95: #{tpu_custom_call.1} parent=5 // pred_region
        %s1001 = ssub.s32 %s29, 2
        // Predicated region
        $region97: #{tpu_custom_call.1} parent=95 // pred_check
          %p1002 = pneg %p313
        $region98: #{tpu_custom_call.1} parent=95 // pred_check_branch
          %1004 = sbr.rel (%p1002) target = $region100
        $region99: #{tpu_custom_call.1} parent=95 // pred_region
          %s1005 = sand.u32 %s298, 1
          %s1006 = scalar_lea.sflag [#allocation5], %s1005
          %s1007 = sand.u32 %s298, 1
          %s1008 = smul.addr %s1007, 8
          %s1009 = scalar_lea.vmem [#allocation15], %s1008
          %1011 = dma.done %s1006, 128
        $region100: #{tpu_custom_call.1} parent=95 // pred_fallthru
          _
      $region96: #{tpu_custom_call.1} parent=5 // pred_fallthru
        _
    $region6: #{tpu_custom_call.1} parent=1 // loop_footer
      %s33 = sadd.s32 1, %s29
    $region7: #{tpu_custom_call.1} parent=1 // loop_footer_branch
      %28 = sbr.rel target = $region3
    $region8: #{tpu_custom_call.1} parent=1 // loop_exit
      _
    %1012 = vsyncpa [#allocation4], 1
    %s1013 = scalar_lea.sflag [#allocation4], 1
    %1014 = vsyncpa %s1013, 1
    %1015 = vsyncpa [#allocation7], 1
    %s1016 = scalar_lea.sflag [#allocation7], 1
    %1017 = vsyncpa %s1016, 1
    %1018 = vsyncpa [#allocation10], 1
    %s1019 = scalar_lea.sflag [#allocation10], 1
    %1020 = vsyncpa %s1019, 1
    %1021 = vsyncpa [#allocation13], 1
    %s1022 = scalar_lea.sflag [#allocation13], 1
    %1023 = vsyncpa %s1022, 1
    %1024 = vsyncpa [#allocation5], 1
    %s1025 = scalar_lea.sflag [#allocation5], 1
    %1026 = vsyncpa %s1025, 1

</llo_original>
